<compile_context>
chip_gen: v7x
topology: tpu7x:2x2x1
jax: 0.10.0
libtpu: 0.0.40
codegen_flags: <defaults>
</compile_context>

<pallas_src>
import functools

import jax
import jax.numpy as jnp
from jax import lax
from jax.experimental import pallas as pl
from jax.experimental.pallas import tpu as pltpu


def _round_up(x: int, m: int) -> int:
    return ((x + m - 1) // m) * m


def _ce_kernel(prd_ref, trg_ref, out_ref, acc_ref):
    # prd_ref: (TB, TC) f32   trg_ref: (TB, 1) i32
    # out_ref: (TB, 1) f32 per-sample loss   acc_ref: (TB, 1) f32 scratch
    k = pl.program_id(1)

    @pl.when(k == 0)
    def _():
        acc_ref[...] = jnp.zeros_like(acc_ref)

    prd = prd_ref[...]                                   # (TB, TC)
    trg = trg_ref[...]                                   # (TB, 1)
    tb, tc = prd.shape
    col = k * tc + lax.broadcasted_iota(jnp.int32, (tb, tc), 1)
    # Masked pick of the target-class probability; scalar 0.0 (no zeros_like
    # materialization on the big tile).
    picked = jnp.sum(jnp.where(col == trg, prd, 0.0), axis=-1, keepdims=True)
    acc_ref[...] += picked

    @pl.when(k == pl.num_programs(1) - 1)
    def _():
        out_ref[...] = -jnp.log(acc_ref[...])


@functools.partial(jax.jit, static_argnames=("tb_max", "tc_max"))
def cross_entropy_loss(prd: jax.Array, trg: jax.Array,
                       *, tb_max: int = 256, tc_max: int = 2048) -> jax.Array:
    """prd: (B, C) float probabilities, trg: (B,) int labels -> scalar f32 sum-loss."""
    B, C = prd.shape
    prd = prd.astype(jnp.float32)
    trg = trg.astype(jnp.int32)

    # Tile sizes: sublane axis multiple of 8, lane axis multiple of 128.
    bp8 = _round_up(B, 8)
    TB = min(tb_max, bp8)
    Bp = _round_up(B, TB)

    cp128 = _round_up(C, 128)
    TC = min(tc_max, cp128)
    Cp = _round_up(C, TC)

    # Pad: extra columns are 0-prob and can never match a (valid) target, so
    # they contribute 0; padded rows produce garbage losses that are sliced off
    # before the final sum.
    prd_p = jnp.pad(prd, ((0, Bp - B), (0, Cp - C)))
    trg_p = jnp.pad(trg, (0, Bp - B)).reshape(Bp, 1)

    grid = (Bp // TB, Cp // TC)

    per_sample = pl.pallas_call(
        _ce_kernel,
        out_shape=jax.ShapeDtypeStruct((Bp, 1), jnp.float32),
        grid_spec=pltpu.PrefetchScalarGridSpec(
            num_scalar_prefetch=0,
            grid=grid,
            in_specs=[
                pl.BlockSpec((TB, TC), lambda i, k: (i, k)),
                pl.BlockSpec((TB, 1), lambda i, k: (i, 0)),
            ],
            out_specs=pl.BlockSpec((TB, 1), lambda i, k: (i, 0)),
            scratch_shapes=[pltpu.VMEM((TB, 1), jnp.float32)],
        ),
        compiler_params=pltpu.CompilerParams(
            dimension_semantics=("parallel", "arbitrary"),
        ),
        cost_estimate=pl.CostEstimate(
            flops=2 * Bp * Cp,
            transcendentals=Bp,
            bytes_accessed=Bp * Cp * 4 + Bp * 4 + Bp * 4,
        ),
    )(prd_p, trg_p)

    # Sum of valid per-sample losses (reference sums, does NOT average).
    return jnp.sum(per_sample[:B, 0])


def _reference(prd, trg):
    return jnp.sum(-jnp.log(prd[jnp.arange(prd.shape[0]), trg]))


if __name__ == "__main__":
    key = jax.random.PRNGKey(0)

    # Case 1: small shapes matching the module (batch=8, classes=16).
    k1, k2, k3, k4 = jax.random.split(key, 4)
    B1, C1 = 8, 16
    logits1 = jax.random.normal(k1, (B1, C1), dtype=jnp.float32)
    prd1 = jax.nn.softmax(logits1, axis=-1)
    trg1 = jax.random.randint(k2, (B1,), 0, C1, dtype=jnp.int32)

    loss1 = cross_entropy_loss(prd1, trg1)
    jax.block_until_ready(loss1)
    ref1 = _reference(prd1, trg1)
    assert jnp.allclose(loss1, ref1, rtol=1e-5, atol=1e-5), (loss1, ref1)

    # Case 2: ragged shapes + small forced tiles to exercise padding and the
    # multi-step class-axis reduction path.
    B2, C2 = 12, 300
    logits2 = jax.random.normal(k3, (B2, C2), dtype=jnp.float32)
    prd2 = jax.nn.softmax(logits2, axis=-1)
    trg2 = jax.random.randint(k4, (B2,), 0, C2, dtype=jnp.int32)

    loss2 = cross_entropy_loss(prd2, trg2, tb_max=8, tc_max=128)
    jax.block_until_ready(loss2)
    ref2 = _reference(prd2, trg2)
    assert jnp.allclose(loss2, ref2, rtol=1e-5, atol=1e-5), (loss2, ref2)

    print("KERNEL_OK")
</pallas_src>

<mosaic_0001>
module attributes {stable_mosaic.version = 11 : i64} {
  func.func @_ce_kernel(%arg0: i32, %arg1: i32, %arg2: memref<8x128xf32, #tpu.memory_space<vmem>>, %arg3: memref<8x1xi32, #tpu.memory_space<vmem>>, %arg4: memref<8x1xf32, #tpu.memory_space<vmem>>, %arg5: memref<8x1xf32, #tpu.memory_space<vmem>>) attributes {dimension_semantics = [#tpu.dimension_semantics<parallel>, #tpu.dimension_semantics<arbitrary>], iteration_bounds = array<i64: 1, 1>, scalar_prefetch = 0 : i64, scratch_operands = 1 : i64, tpu.core_type = #tpu.core_type<tc>, window_params = [{transform_indices = @transform_0, window_bounds = array<i64: 8, 128>}, {transform_indices = @transform_1, window_bounds = array<i64: 8, 1>}, {transform_indices = @transform_2, window_bounds = array<i64: 8, 1>}]} {
    %c0_i32 = arith.constant 0 : i32
    %0 = arith.cmpi eq, %arg1, %c0_i32 : i32
    %1 = arith.extui %0 : i1 to i32
    %c0_i32_0 = arith.constant 0 : i32
    %2 = arith.cmpi ne, %1, %c0_i32_0 : i32
    scf.if %2 {
      %cst_11 = arith.constant 0.000000e+00 : f32
      %21 = vector.broadcast %cst_11 : f32 to vector<8x1xf32>
      %c0_12 = arith.constant 0 : index
      %c0_13 = arith.constant 0 : index
      %22 = vector.load %arg5[%c0_12, %c0_13] : memref<8x1xf32, #tpu.memory_space<vmem>>, vector<8x1xf32>
      tpu.vector_store %arg5[%c0_12, %c0_13], %21 {strides = array<i32>} : memref<8x1xf32, #tpu.memory_space<vmem>>, vector<8x1xf32>,
    } else {
    }
    %c0 = arith.constant 0 : index
    %c0_1 = arith.constant 0 : index
    %3 = vector.load %arg2[%c0, %c0_1] : memref<8x128xf32, #tpu.memory_space<vmem>>, vector<8x128xf32>
    %c0_2 = arith.constant 0 : index
    %c0_3 = arith.constant 0 : index
    %4 = vector.load %arg3[%c0_2, %c0_3] : memref<8x1xi32, #tpu.memory_space<vmem>>, vector<8x1xi32>
    %c128_i32 = arith.constant 128 : i32
    %5 = arith.muli %arg1, %c128_i32 : i32
    %6 = tpu.iota {dimensions = array<i32: 1>} : vector<8x128xi32>
    %7 = vector.broadcast %5 : i32 to vector<8x128xi32>
    %8 = arith.addi %7, %6 : vector<8x128xi32>
    %9 = vector.broadcast %4 : vector<8x1xi32> to vector<8x128xi32>
    %10 = arith.cmpi eq, %8, %9 : vector<8x128xi32>
    %cst = arith.constant 0.000000e+00 : f32
    %11 = vector.broadcast %cst : f32 to vector<8x128xf32>
    %12 = arith.select %10, %3, %11 : vector<8x128xi1>, vector<8x128xf32>
    %cst_4 = arith.constant dense<0.000000e+00> : vector<8xf32>
    %13 = vector.multi_reduction <add>, %12, %cst_4 [1] : vector<8x128xf32> to vector<8xf32>
    %14 = vector.shape_cast %13 : vector<8xf32> to vector<8x1xf32>
    %c0_5 = arith.constant 0 : index
    %c0_6 = arith.constant 0 : index
    %15 = vector.load %arg5[%c0_5, %c0_6] : memref<8x1xf32, #tpu.memory_space<vmem>>, vector<8x1xf32>
    %16 = arith.addf %15, %14 : vector<8x1xf32>
    %c0_7 = arith.constant 0 : index
    %c0_8 = arith.constant 0 : index
    %17 = vector.load %arg5[%c0_7, %c0_8] : memref<8x1xf32, #tpu.memory_space<vmem>>, vector<8x1xf32>
    tpu.vector_store %arg5[%c0_7, %c0_8], %16 {strides = array<i32>} : memref<8x1xf32, #tpu.memory_space<vmem>>, vector<8x1xf32>,
    %c0_i32_9 = arith.constant 0 : i32
    %18 = arith.cmpi eq, %arg1, %c0_i32_9 : i32
    %19 = arith.extui %18 : i1 to i32
    %c0_i32_10 = arith.constant 0 : i32
    %20 = arith.cmpi ne, %19, %c0_i32_10 : i32
    scf.if %20 {
      %c0_11 = arith.constant 0 : index
      %c0_12 = arith.constant 0 : index
      %21 = vector.load %arg5[%c0_11, %c0_12] : memref<8x1xf32, #tpu.memory_space<vmem>>, vector<8x1xf32>
      %22 = math.log %21 : vector<8x1xf32>
      %cst_13 = arith.constant 0.000000e+00 : f32
      %23 = vector.broadcast %cst_13 : f32 to vector<8x1xf32>
      %24 = arith.subf %23, %22 : vector<8x1xf32>
      %c0_14 = arith.constant 0 : index
      %c0_15 = arith.constant 0 : index
      %25 = vector.load %arg4[%c0_14, %c0_15] : memref<8x1xf32, #tpu.memory_space<vmem>>, vector<8x1xf32>
      tpu.vector_store %arg4[%c0_14, %c0_15], %24 {strides = array<i32>} : memref<8x1xf32, #tpu.memory_space<vmem>>, vector<8x1xf32>,
    } else {
    }
    return
  }
  func.func @transform_0(%arg0: i32, %arg1: i32) -> (i32, i32) {
    %c0_i32 = arith.constant 0 : i32
    return %arg0, %arg1 : i32, i32
  }
  func.func @transform_1(%arg0: i32, %arg1: i32) -> (i32, i32) {
    %c0_i32 = arith.constant 0 : i32
    %c0_i32_0 = arith.constant 0 : i32
    return %arg0, %c0_i32 : i32, i32
  }
  func.func @transform_2(%arg0: i32, %arg1: i32) -> (i32, i32) {
    %c0_i32 = arith.constant 0 : i32
    %c0_i32_0 = arith.constant 0 : i32
    return %arg0, %c0_i32 : i32, i32
  }
}

</mosaic_0001>

<llo_original>
// kernel: cross_entropy_loss.1
$region0: #{cross_entropy_loss.1}
  #allocation0 [shape = 'u32[]', space=smem, size = 0x4, offset = 0x4, fixed_abs, tag = 'smem constant byte address 0x4 - core index']
  #allocation1 [shape = 'u32[144,128]{1,0:T(1,128)}', space=vmem, size = 0x12000, scoped, tag = 'internal scratch']
  #allocation2 [shape = 'f32[8,1]{1,0:T(8,128)}', space=vmem, size = 0x1000, scoped, tag = 'scratch operand']
  %s0 = inlined_call_operand.vmem [shape: f32[8,128], index: 0, kind: input, shape index: {}]
  %s1 = inlined_call_operand.vmem [shape: s32[8,1], index: 1, kind: input, shape index: {}]
  %s2 = inlined_call_operand.vmem [shape: f32[8,1], index: 2, kind: output, shape index: {}]
  %s3 = sld [smem:[#allocation0]]
  $region26: #{cross_entropy_loss.1} parent=0
    _
  %s5 = ssub.s32 1, %s3
  %s6 = scalar_select 0, %s5, %s3
  // Predicated region
  $region2: #{cross_entropy_loss.1} parent=0 // pred_check
    _
  $region3: #{cross_entropy_loss.1} parent=0 // pred_check_branch
    %8 = sbr.rel (0) target = $region5
  $region4: #{cross_entropy_loss.1} parent=0 // pred_region
    _
  $region5: #{cross_entropy_loss.1} parent=0 // pred_fallthru
    _
  // Predicated region
  $region6: #{cross_entropy_loss.1} parent=0 // pred_check
    _
  $region7: #{cross_entropy_loss.1} parent=0 // pred_check_branch
    %10 = sbr.rel (0) target = $region9
  $region8: #{cross_entropy_loss.1} parent=0 // pred_region
    _
  $region9: #{cross_entropy_loss.1} parent=0 // pred_fallthru
    _
  %p11 = scmp.eq.s32.totalorder 0, 0
  // Predicated region
  $region10: #{cross_entropy_loss.1} parent=0 // pred_check
    %p12 = pneg %p11
  $region11: #{cross_entropy_loss.1} parent=0 // pred_check_branch
    %14 = sbr.rel (%p12) target = $region13
  $region12: #{cross_entropy_loss.1} parent=0 // pred_region
    %vm15 = vcmask 7168
    %16 = vst.msk [vmem:[#allocation2] sm:$0xff] %vm15, 0.0
  $region13: #{cross_entropy_loss.1} parent=0 // pred_fallthru
    _
  %v17 = vld [vmem:[%s0] sm:$0xff]
  %v18 = vld [vmem:[%s1] sm:$0xff]
  %s19 = smul.u32 0, 128
  %v20 = vlaneseq
  %v21 = vand.u32 %v20, 127
  %v22 = vstv %s19
  %v23 = vadd.s32 %v22, %v21
  %24 = vset.pattern.permute.xlu0 0
  %25 = vperm.xlu0 %24, %v18
  %v26 = vpop.permute.xlu0 %25
  %vm27 = vcmp.eq.s32.totalorder %v23, %v26
  %v28 = vsel %vm27, %v17, 0.0
  %29 = vadd.xlane.f32.xlu0 %v28
  %v30 = vpop.xlane.xlu0 %29
  %v31 = vld [vmem:[#allocation2] sm:$0xff]
  %v32 = vadd.f32 %v31, %v30
  %vm33 = vcmask 7168
  %34 = vst.msk [vmem:[#allocation2] sm:$0xff] %vm33, %v32
  // Predicated region
  $region14: #{cross_entropy_loss.1} parent=0 // pred_check
    %p35 = pneg %p11
  $region15: #{cross_entropy_loss.1} parent=0 // pred_check_branch
    %37 = sbr.rel (%p35) target = $region17
  $region16: #{cross_entropy_loss.1} parent=0 // pred_region
    %v38 = vld [vmem:[#allocation2] sm:$0xff]
    %v39 = vlog2.pop %v38
    %v40 = vmul.f32 %v39, 0.6931472
    %v41 = vsub.f32 0.0, %v40
    %42 = vst.msk [vmem:[%s2] sm:$0xff] %vm33, %v41
  $region17: #{cross_entropy_loss.1} parent=0 // pred_fallthru
    _
  // Predicated region
  $region18: #{cross_entropy_loss.1} parent=0 // pred_check
    _
  $region19: #{cross_entropy_loss.1} parent=0 // pred_check_branch
    %44 = sbr.rel (0) target = $region21
  $region20: #{cross_entropy_loss.1} parent=0 // pred_region
    _
  $region21: #{cross_entropy_loss.1} parent=0 // pred_fallthru
    _
  // Predicated region
  $region22: #{cross_entropy_loss.1} parent=0 // pred_check
    _
  $region23: #{cross_entropy_loss.1} parent=0 // pred_check_branch
    %46 = sbr.rel (0) target = $region25
  $region24: #{cross_entropy_loss.1} parent=0 // pred_region
    _
  $region25: #{cross_entropy_loss.1} parent=0 // pred_fallthru
    _

</llo_original>
